<compile_context>
chip_gen: v7x
topology: tpu7x:2x2x1
jax: 0.10.0
libtpu: 0.0.40
codegen_flags: <defaults>
</compile_context>

<pallas_src>
import jax
import jax.numpy as jnp
from jax.experimental import pallas as pl
from jax.experimental.pallas import tpu as pltpu

LANE = 128
SUBLANE = 8


def _round_up(x, m):
    return ((x + m - 1) // m) * m


def _vmem_capacity_bytes():
    try:
        return int(pltpu.get_tpu_info().vmem_capacity_bytes)
    except Exception:
        return 64 << 20  # conservative default (v7x per-TensorCore VMEM)


def _mlp_kernel(x_ref, w1_ref, b1_ref, w2_ref, b2_ref, o_ref, h_acc, y_acc):
    """Fused Linear -> ReLU -> (Dropout p=0 == identity) -> Linear.

    Grid = (batch block i, hidden column block j2, layer-1 K block j1).
    h_acc accumulates layer-1 partials for hidden column block j2 (f32);
    y_acc accumulates layer-2 partials over j2 (f32).
    """
    j2 = pl.program_id(1)
    j1 = pl.program_id(2)
    nj2 = pl.num_programs(1)
    nj1 = pl.num_programs(2)

    @pl.when(j1 == 0)
    def _init_h():
        h_acc[...] = jnp.zeros_like(h_acc)

    @pl.when((j2 == 0) & (j1 == 0))
    def _init_y():
        y_acc[...] = jnp.zeros_like(y_acc)

    # Layer-1 partial product on the MXU, f32 accumulation.
    h_acc[...] += jnp.dot(x_ref[...], w1_ref[...],
                          preferred_element_type=jnp.float32)

    @pl.when(j1 == nj1 - 1)
    def _layer2():
        # Bias + ReLU (Dropout(p=0.0) is the identity), then layer-2 partial.
        h = jnp.maximum(h_acc[...] + b1_ref[...], 0.0).astype(w2_ref.dtype)
        y_acc[...] += jnp.dot(h, w2_ref[...],
                              preferred_element_type=jnp.float32)

    @pl.when((j2 == nj2 - 1) & (j1 == nj1 - 1))
    def _finalize():
        o_ref[...] = (y_acc[...] + b2_ref[...]).astype(o_ref.dtype)


def prepare_params(w1, b1, w2, b2, compute_dtype=jnp.bfloat16):
    """Pad parameters ONCE to lane-dense shapes (multiples of 128).

    Zero padding is mathematically inert: padded x columns hit zero W1 rows,
    padded b1/W2/b2 entries are zero, so valid outputs are exact and padded
    output columns are exactly zero (sliced off after the call).
    """
    in_size, out_size = w1.shape[0], w2.shape[1]
    K = _round_up(max(in_size, LANE), LANE)
    N = _round_up(max(out_size, LANE), LANE)
    w1_p = jnp.zeros((K, K), compute_dtype).at[:in_size, :in_size].set(
        w1.astype(compute_dtype))
    b1_p = jnp.zeros((1, K), jnp.float32).at[0, :in_size].set(
        b1.astype(jnp.float32))
    w2_p = jnp.zeros((K, N), compute_dtype).at[:in_size, :out_size].set(
        w2.astype(compute_dtype))
    b2_p = jnp.zeros((1, N), jnp.float32).at[0, :out_size].set(
        b2.astype(jnp.float32))
    return {"w1": w1_p, "b1": b1_p, "w2": w2_p, "b2": b2_p,
            "in_size": in_size, "out_size": out_size,
            "compute_dtype": compute_dtype}


def network_forward(x, params, *, batch_tile=1024, k_tile=None, out_dtype=None):
    """Fused MLP forward.  `params` comes from `prepare_params` (padded once)."""
    w1_p, b1_p, w2_p, b2_p = params["w1"], params["b1"], params["w2"], params["b2"]
    in_size, out_size = params["in_size"], params["out_size"]
    cdtype = params["compute_dtype"]

    B, xf = x.shape
    assert xf == in_size, (xf, in_size)
    K, N = w1_p.shape[0], w2_p.shape[1]
    out_dtype = x.dtype if out_dtype is None else out_dtype

    # K tile: a multiple of 128 that divides K (K is already a multiple of 128).
    if k_tile is None:
        if K >= 512 and K % 512 == 0:
            k_tile = 512
        elif K >= 256 and K % 256 == 0:
            k_tile = 256
        else:
            k_tile = 128
        k_tile = min(k_tile, K)
    assert K % k_tile == 0 and k_tile % LANE == 0
    tk = k_tile
    nk = K // tk
    wbuf = 1 if nk == 1 else 2  # single-buffer weights only when truly resident

    cbytes = jnp.dtype(cdtype).itemsize
    obytes = jnp.dtype(out_dtype).itemsize

    def footprint(tb):
        f = 2 * tb * tk * cbytes              # x tile (double-buffered)
        f += 2 * tb * N * obytes              # out tile (double-buffered)
        f += wbuf * tk * tk * cbytes          # W1 block(s)
        f += wbuf * tk * N * cbytes           # W2 block(s)
        f += wbuf * SUBLANE * (tk + N) * 4    # biases (sublane-padded)
        f += tb * tk * 4 + tb * N * 4         # h_acc / y_acc scratch
        return f

    vmem_cap = _vmem_capacity_bytes()
    budget = int(0.55 * vmem_cap)

    # Batch tile: big by default, clamped to the batch, shrunk to fit VMEM.
    tb = _round_up(min(batch_tile, max(B, SUBLANE)), SUBLANE)
    tb = min(tb, _round_up(B, SUBLANE))
    while tb > SUBLANE and footprint(tb) > budget:
        tb = max(SUBLANE, _round_up(tb // 2, SUBLANE))
    # 2 TensorCores per chip on v7x: keep >=2 grid steps on the parallel batch
    # axis when the batch is large enough to split.
    if B >= 2 * LANE and _round_up(B, tb) // tb <= 1:
        tb = min(tb, _round_up((B + 1) // 2, SUBLANE))
    Bp = _round_up(B, tb)
    nb = Bp // tb

    # Pad/cast x only when needed (skip entirely for aligned shapes).
    if Bp != B or K != in_size:
        x_p = jnp.zeros((Bp, K), cdtype).at[:B, :in_size].set(x.astype(cdtype))
    else:
        x_p = x.astype(cdtype)

    # Resident (constant-index) blocks are single-buffered.
    res_kwargs = dict(pipeline_mode=pl.Buffered(buffer_count=1)) if nk == 1 else {}
    in_specs = [
        pl.BlockSpec((tb, tk), lambda i, j2, j1: (i, j1)),                  # x
        pl.BlockSpec((tk, tk), lambda i, j2, j1: (j1, j2), **res_kwargs),   # W1
        pl.BlockSpec((1, tk), lambda i, j2, j1: (0, j2), **res_kwargs),     # b1
        pl.BlockSpec((tk, N), lambda i, j2, j1: (j2, 0), **res_kwargs),     # W2
        pl.BlockSpec((1, N), lambda i, j2, j1: (0, 0),
                     pipeline_mode=pl.Buffered(buffer_count=1)),            # b2
    ]
    out_spec = pl.BlockSpec((tb, N), lambda i, j2, j1: (i, 0))  # lane-dense out

    fp = footprint(tb)
    vmem_limit = int(min(vmem_cap, max(fp + (fp >> 2) + (2 << 20), 16 << 20)))

    cost = pl.CostEstimate(
        flops=2 * Bp * K * (K + N),
        transcendentals=0,
        bytes_accessed=int(
            Bp * K * cbytes * nk                                  # x (re-read per hidden block)
            + (K * K + K * N) * cbytes * (nb if nk > 1 else 1)    # weights
            + (K + N) * 4                                         # biases
            + Bp * N * obytes),                                   # output
    )

    y_p = pl.pallas_call(
        _mlp_kernel,
        out_shape=jax.ShapeDtypeStruct((Bp, N), out_dtype),
        grid_spec=pltpu.PrefetchScalarGridSpec(
            num_scalar_prefetch=0,
            grid=(nb, nk, nk),
            in_specs=in_specs,
            out_specs=out_spec,
            scratch_shapes=[
                pltpu.VMEM((tb, tk), jnp.float32),  # h_acc
                pltpu.VMEM((tb, N), jnp.float32),   # y_acc
            ],
        ),
        compiler_params=pltpu.CompilerParams(
            dimension_semantics=("parallel", "arbitrary", "arbitrary"),
            vmem_limit_bytes=vmem_limit,
        ),
        cost_estimate=cost,
    )(x_p, w1_p, b1_p, w2_p, b2_p)

    return y_p[:B, :out_size]


if __name__ == "__main__":
    def init_params(key, in_size, out_size):
        kw1, kb1, kw2, kb2 = jax.random.split(key, 4)
        lim = 1.0 / (in_size ** 0.5)
        w1 = jax.random.uniform(kw1, (in_size, in_size), jnp.float32, -lim, lim)
        b1 = jax.random.uniform(kb1, (in_size,), jnp.float32, -lim, lim)
        w2 = jax.random.uniform(kw2, (in_size, out_size), jnp.float32, -lim, lim)
        b2 = jax.random.uniform(kb2, (out_size,), jnp.float32, -lim, lim)
        return w1, b1, w2, b2

    def ref_forward(x, w1, b1, w2, b2):
        h = jnp.maximum(
            jnp.dot(x, w1, precision=jax.lax.Precision.HIGHEST) + b1, 0.0)
        return jnp.dot(h, w2, precision=jax.lax.Precision.HIGHEST) + b2

    key = jax.random.PRNGKey(0)
    k1, k2, k3 = jax.random.split(key, 3)

    # Case 1: small shapes, f32 operands (tight check vs. f32 reference).
    B, IN, OUT = 16, 32, 8
    x = jax.random.normal(k1, (B, IN), dtype=jnp.float32)
    w1, b1, w2, b2 = init_params(k2, IN, OUT)
    p_f32 = prepare_params(w1, b1, w2, b2, compute_dtype=jnp.float32)
    out_f32 = jax.block_until_ready(network_forward(x, p_f32))
    ref = ref_forward(x, w1, b1, w2, b2)
    assert out_f32.shape == (B, OUT)
    assert jnp.allclose(out_f32, ref, atol=1e-4, rtol=1e-4), "f32 path mismatch"

    # Case 2: default bf16 operands with f32 accumulation (loose tolerance).
    p_bf16 = prepare_params(w1, b1, w2, b2)  # compute_dtype defaults to bf16
    out_bf16 = jax.block_until_ready(network_forward(x, p_bf16))
    assert out_bf16.shape == (B, OUT)
    assert jnp.allclose(out_bf16, ref, atol=3e-2, rtol=3e-2), "bf16 path mismatch"

    # Case 3: exercise the K-tiled (accumulator) path: in_size=256, k_tile=128
    # -> 2x2 reduction grid, non-constant weight index_maps.
    B3, IN3, OUT3 = 32, 256, 8
    x3 = jax.random.normal(k3, (B3, IN3), dtype=jnp.float32)
    w13, b13, w23, b23 = init_params(jax.random.fold_in(key, 7), IN3, OUT3)
    p3 = prepare_params(w13, b13, w23, b23, compute_dtype=jnp.float32)
    out3 = jax.block_until_ready(network_forward(x3, p3, k_tile=128))
    ref3 = ref_forward(x3, w13, b13, w23, b23)
    assert out3.shape == (B3, OUT3)
    assert jnp.allclose(out3, ref3, atol=1e-4, rtol=1e-4), "K-tiled path mismatch"

    print("KERNEL_OK")
</pallas_src>

<mosaic_0001>
module attributes {stable_mosaic.version = 11 : i64} {
  func.func @_mlp_kernel(%arg0: i32, %arg1: i32, %arg2: i32, %arg3: memref<16x128xf32, #tpu.memory_space<vmem>>, %arg4: memref<128x128xf32, #tpu.memory_space<vmem>>, %arg5: memref<1x128xf32, #tpu.memory_space<vmem>>, %arg6: memref<128x128xf32, #tpu.memory_space<vmem>>, %arg7: memref<1x128xf32, #tpu.memory_space<vmem>>, %arg8: memref<16x128xf32, #tpu.memory_space<vmem>>, %arg9: memref<16x128xf32, #tpu.memory_space<vmem>>, %arg10: memref<16x128xf32, #tpu.memory_space<vmem>>) attributes {dimension_semantics = [#tpu.dimension_semantics<parallel>, #tpu.dimension_semantics<arbitrary>, #tpu.dimension_semantics<arbitrary>], iteration_bounds = array<i64: 1, 1, 1>, scalar_prefetch = 0 : i64, scratch_operands = 2 : i64, tpu.core_type = #tpu.core_type<tc>, window_params = [{transform_indices = @transform_0, window_bounds = array<i64: 16, 128>}, {pipeline_mode = #tpu.pipeline_mode<synchronous>, transform_indices = @transform_1, window_bounds = array<i64: 128, 128>}, {pipeline_mode = #tpu.pipeline_mode<synchronous>, transform_indices = @transform_2, window_bounds = array<i64: 1, 128>}, {pipeline_mode = #tpu.pipeline_mode<synchronous>, transform_indices = @transform_3, window_bounds = array<i64: 128, 128>}, {pipeline_mode = #tpu.pipeline_mode<synchronous>, transform_indices = @transform_4, window_bounds = array<i64: 1, 128>}, {transform_indices = @transform_5, window_bounds = array<i64: 16, 128>}]} {
    %c0_i32 = arith.constant 0 : i32
    %0 = arith.cmpi eq, %arg2, %c0_i32 : i32
    %1 = arith.extui %0 : i1 to i32
    %c0_i32_0 = arith.constant 0 : i32
    %2 = arith.cmpi ne, %1, %c0_i32_0 : i32
    scf.if %2 {
      %cst_16 = arith.constant 0.000000e+00 : f32
      %22 = vector.broadcast %cst_16 : f32 to vector<16x128xf32>
      %c0_17 = arith.constant 0 : index
      %c0_18 = arith.constant 0 : index
      %23 = vector.load %arg9[%c0_17, %c0_18] : memref<16x128xf32, #tpu.memory_space<vmem>>, vector<16x128xf32>
      tpu.vector_store %arg9[%c0_17, %c0_18], %22 {strides = array<i32>} : memref<16x128xf32, #tpu.memory_space<vmem>>, vector<16x128xf32>,
    } else {
    }
    %c0_i32_1 = arith.constant 0 : i32
    %3 = arith.cmpi eq, %arg1, %c0_i32_1 : i32
    %c0_i32_2 = arith.constant 0 : i32
    %4 = arith.cmpi eq, %arg2, %c0_i32_2 : i32
    %5 = arith.andi %3, %4 : i1
    %6 = arith.extui %5 : i1 to i32
    %c0_i32_3 = arith.constant 0 : i32
    %7 = arith.cmpi ne, %6, %c0_i32_3 : i32
    scf.if %7 {
      %cst_16 = arith.constant 0.000000e+00 : f32
      %22 = vector.broadcast %cst_16 : f32 to vector<16x128xf32>
      %c0_17 = arith.constant 0 : index
      %c0_18 = arith.constant 0 : index
      %23 = vector.load %arg10[%c0_17, %c0_18] : memref<16x128xf32, #tpu.memory_space<vmem>>, vector<16x128xf32>
      tpu.vector_store %arg10[%c0_17, %c0_18], %22 {strides = array<i32>} : memref<16x128xf32, #tpu.memory_space<vmem>>, vector<16x128xf32>,
    } else {
    }
    %c0 = arith.constant 0 : index
    %c0_4 = arith.constant 0 : index
    %8 = vector.load %arg9[%c0, %c0_4] : memref<16x128xf32, #tpu.memory_space<vmem>>, vector<16x128xf32>
    %c0_5 = arith.constant 0 : index
    %c0_6 = arith.constant 0 : index
    %9 = vector.load %arg3[%c0_5, %c0_6] : memref<16x128xf32, #tpu.memory_space<vmem>>, vector<16x128xf32>
    %c0_7 = arith.constant 0 : index
    %c0_8 = arith.constant 0 : index
    %10 = vector.load %arg4[%c0_7, %c0_8] : memref<128x128xf32, #tpu.memory_space<vmem>>, vector<128x128xf32>
    %cst = arith.constant dense<0.000000e+00> : vector<16x128xf32>
    %11 = tpu.matmul %9, %10, %cst {dimension_numbers = #tpu.dot_dimension_numbers<[1], [0], [0], [1], [0, 0, 1, 1], [], []>} : vector<16x128xf32>, vector<128x128xf32>, vector<16x128xf32> -> vector<16x128xf32>
    %12 = arith.addf %8, %11 : vector<16x128xf32>
    %c0_9 = arith.constant 0 : index
    %c0_10 = arith.constant 0 : index
    %13 = vector.load %arg9[%c0_9, %c0_10] : memref<16x128xf32, #tpu.memory_space<vmem>>, vector<16x128xf32>
    tpu.vector_store %arg9[%c0_9, %c0_10], %12 {strides = array<i32>} : memref<16x128xf32, #tpu.memory_space<vmem>>, vector<16x128xf32>,
    %c0_i32_11 = arith.constant 0 : i32
    %14 = arith.cmpi eq, %arg2, %c0_i32_11 : i32
    %15 = arith.extui %14 : i1 to i32
    %c0_i32_12 = arith.constant 0 : i32
    %16 = arith.cmpi ne, %15, %c0_i32_12 : i32
    scf.if %16 {
      %c0_16 = arith.constant 0 : index
      %c0_17 = arith.constant 0 : index
      %22 = vector.load %arg9[%c0_16, %c0_17] : memref<16x128xf32, #tpu.memory_space<vmem>>, vector<16x128xf32>
      %c0_18 = arith.constant 0 : index
      %c0_19 = arith.constant 0 : index
      %23 = vector.load %arg5[%c0_18, %c0_19] : memref<1x128xf32, #tpu.memory_space<vmem>>, vector<1x128xf32>
      %24 = vector.broadcast %23 : vector<1x128xf32> to vector<16x128xf32>
      %25 = arith.addf %22, %24 : vector<16x128xf32>
      %cst_20 = arith.constant 0.000000e+00 : f32
      %26 = vector.broadcast %cst_20 : f32 to vector<16x128xf32>
      %27 = arith.maximumf %25, %26 : vector<16x128xf32>
      %c0_21 = arith.constant 0 : index
      %c0_22 = arith.constant 0 : index
      %28 = vector.load %arg10[%c0_21, %c0_22] : memref<16x128xf32, #tpu.memory_space<vmem>>, vector<16x128xf32>
      %c0_23 = arith.constant 0 : index
      %c0_24 = arith.constant 0 : index
      %29 = vector.load %arg6[%c0_23, %c0_24] : memref<128x128xf32, #tpu.memory_space<vmem>>, vector<128x128xf32>
      %cst_25 = arith.constant dense<0.000000e+00> : vector<16x128xf32>
      %30 = tpu.matmul %27, %29, %cst_25 {dimension_numbers = #tpu.dot_dimension_numbers<[1], [0], [0], [1], [0, 0, 1, 1], [], []>} : vector<16x128xf32>, vector<128x128xf32>, vector<16x128xf32> -> vector<16x128xf32>
      %31 = arith.addf %28, %30 : vector<16x128xf32>
      %c0_26 = arith.constant 0 : index
      %c0_27 = arith.constant 0 : index
      %32 = vector.load %arg10[%c0_26, %c0_27] : memref<16x128xf32, #tpu.memory_space<vmem>>, vector<16x128xf32>
      tpu.vector_store %arg10[%c0_26, %c0_27], %31 {strides = array<i32>} : memref<16x128xf32, #tpu.memory_space<vmem>>, vector<16x128xf32>,
    } else {
    }
    %c0_i32_13 = arith.constant 0 : i32
    %17 = arith.cmpi eq, %arg1, %c0_i32_13 : i32
    %c0_i32_14 = arith.constant 0 : i32
    %18 = arith.cmpi eq, %arg2, %c0_i32_14 : i32
    %19 = arith.andi %17, %18 : i1
    %20 = arith.extui %19 : i1 to i32
    %c0_i32_15 = arith.constant 0 : i32
    %21 = arith.cmpi ne, %20, %c0_i32_15 : i32
    scf.if %21 {
      %c0_16 = arith.constant 0 : index
      %c0_17 = arith.constant 0 : index
      %22 = vector.load %arg10[%c0_16, %c0_17] : memref<16x128xf32, #tpu.memory_space<vmem>>, vector<16x128xf32>
      %c0_18 = arith.constant 0 : index
      %c0_19 = arith.constant 0 : index
      %23 = vector.load %arg7[%c0_18, %c0_19] : memref<1x128xf32, #tpu.memory_space<vmem>>, vector<1x128xf32>
      %24 = vector.broadcast %23 : vector<1x128xf32> to vector<16x128xf32>
      %25 = arith.addf %22, %24 : vector<16x128xf32>
      %c0_20 = arith.constant 0 : index
      %c0_21 = arith.constant 0 : index
      %26 = vector.load %arg8[%c0_20, %c0_21] : memref<16x128xf32, #tpu.memory_space<vmem>>, vector<16x128xf32>
      tpu.vector_store %arg8[%c0_20, %c0_21], %25 {strides = array<i32>} : memref<16x128xf32, #tpu.memory_space<vmem>>, vector<16x128xf32>,
    } else {
    }
    return
  }
  func.func @transform_0(%arg0: i32, %arg1: i32, %arg2: i32) -> (i32, i32) {
    %c0_i32 = arith.constant 0 : i32
    return %arg0, %arg2 : i32, i32
  }
  func.func @transform_1(%arg0: i32, %arg1: i32, %arg2: i32) -> (i32, i32) {
    %c0_i32 = arith.constant 0 : i32
    return %arg2, %arg1 : i32, i32
  }
  func.func @transform_2(%arg0: i32, %arg1: i32, %arg2: i32) -> (i32, i32) {
    %c0_i32 = arith.constant 0 : i32
    %c0_i32_0 = arith.constant 0 : i32
    return %c0_i32, %arg1 : i32, i32
  }
  func.func @transform_3(%arg0: i32, %arg1: i32, %arg2: i32) -> (i32, i32) {
    %c0_i32 = arith.constant 0 : i32
    %c0_i32_0 = arith.constant 0 : i32
    return %arg1, %c0_i32 : i32, i32
  }
  func.func @transform_4(%arg0: i32, %arg1: i32, %arg2: i32) -> (i32, i32) {
    %c0_i32 = arith.constant 0 : i32
    %c0_i32_0 = arith.constant 0 : i32
    %c0_i32_1 = arith.constant 0 : i32
    return %c0_i32, %c0_i32_0 : i32, i32
  }
  func.func @transform_5(%arg0: i32, %arg1: i32, %arg2: i32) -> (i32, i32) {
    %c0_i32 = arith.constant 0 : i32
    %c0_i32_0 = arith.constant 0 : i32
    return %arg0, %c0_i32 : i32, i32
  }
}

</mosaic_0001>

<llo_original>
// kernel: tpu_custom_call.1
$region0: #{tpu_custom_call.1}
  #allocation0 [shape = 'u32[]', space=smem, size = 0x4, offset = 0x4, fixed_abs, tag = 'smem constant byte address 0x4 - core index']
  #allocation1 [shape = 'u32[144,128]{1,0:T(1,128)}', space=vmem, size = 0x12000, scoped, tag = 'internal scratch']
  #allocation2 [shape = 'f32[16,128]{1,0:T(8,128)}', space=vmem, size = 0x2000, scoped, tag = 'scratch operand']
  #allocation3 [shape = 'f32[16,128]{1,0:T(8,128)}', space=vmem, size = 0x2000, scoped, tag = 'scratch operand']
  %s0 = inlined_call_operand.hbm [shape: f32[16,128], index: 0, kind: input, shape index: {}]
  %s1 = inlined_call_operand.hbm [shape: f32[128,128], index: 1, kind: input, shape index: {}]
  %s2 = inlined_call_operand.vmem [shape: f32[1,128], index: 2, kind: input, shape index: {}]
  %s3 = inlined_call_operand.hbm [shape: f32[128,128], index: 3, kind: input, shape index: {}]
  %s4 = inlined_call_operand.vmem [shape: f32[1,128], index: 4, kind: input, shape index: {}]
  %s5 = inlined_call_operand.hbm [shape: f32[16,128], index: 5, kind: output, shape index: {}]
  %s6 = sld [smem:[#allocation0]]
  $region58: #{tpu_custom_call.1} parent=0
    _
  %s8 = ssub.s32 1, %s6
  %s9 = scalar_select 0, %s8, %s6
  $region1: #{tpu_custom_call.1} parent=0
    #allocation4 [shape = 'u8[8192]{0}', space=vmem, size = 0x2000, scoped, tag = 'input window, operand 0, single buffered']
    #allocation5 [shape = 's32[1]{0}', space=sflag, size = 0x4, scoped, tag = 'scoped memory for tpu_custom_call.1']
    #allocation6 [shape = 's32[1]{0}', space=sflag, size = 0x4, scoped, tag = 'scoped memory for tpu_custom_call.1']
    #allocation7 [shape = 'u8[65536]{0}', space=vmem, size = 0x10000, scoped, tag = 'input window, operand 1, single buffered']
    #allocation8 [shape = 's32[1]{0}', space=sflag, size = 0x4, scoped, tag = 'scoped memory for tpu_custom_call.1']
    #allocation9 [shape = 'u8[65536]{0}', space=vmem, size = 0x10000, scoped, tag = 'input window, operand 3, single buffered']
    #allocation10 [shape = 'u8[8192]{0}', space=vmem, size = 0x2000, scoped, tag = 'output window, operand 0, single buffered']
    %10 = vsyncpa [#allocation5], 0
    %11 = vsyncpa [#allocation8], 0
    %12 = vsyncpa [#allocation6], 0
    // Predicated region
    $region2: #{tpu_custom_call.1} parent=1 // pred_check
      _
    $region3: #{tpu_custom_call.1} parent=1 // pred_check_branch
      %14 = sbr.rel (0) target = $region5
    $region4: #{tpu_custom_call.1} parent=1 // pred_region
      %s16 = ssub.s32 256, 256
      %17 = vsyncadd [#allocation5], %s16
      %s18 = sshll.u32 [#allocation4], 4
      %s19 = int_to_ptr.vmem [resolvable:$true] %s18
      %24 = dma.hbm_to_vmem [thread:$0]  %s0, 256, %s19, [#allocation5], 128, 128, 8
    $region5: #{tpu_custom_call.1} parent=1 // pred_fallthru
      _
    // Predicated region
    $region6: #{tpu_custom_call.1} parent=1 // pred_check
      _
    $region7: #{tpu_custom_call.1} parent=1 // pred_check_branch
      %26 = sbr.rel (0) target = $region9
    $region8: #{tpu_custom_call.1} parent=1 // pred_region
      %s28 = ssub.s32 2048, 2048
      %29 = vsyncadd [#allocation8], %s28
      %s30 = sshll.u32 [#allocation7], 4
      %s31 = int_to_ptr.vmem [resolvable:$true] %s30
      %36 = dma.hbm_to_vmem [thread:$0]  %s1, 2048, %s31, [#allocation8], 128, 128, 8
    $region9: #{tpu_custom_call.1} parent=1 // pred_fallthru
      _
    // Predicated region
    $region10: #{tpu_custom_call.1} parent=1 // pred_check
      _
    $region11: #{tpu_custom_call.1} parent=1 // pred_check_branch
      %38 = sbr.rel (0) target = $region13
    $region12: #{tpu_custom_call.1} parent=1 // pred_region
      _
    $region13: #{tpu_custom_call.1} parent=1 // pred_fallthru
      _
    // Predicated region
    $region14: #{tpu_custom_call.1} parent=1 // pred_check
      _
    $region15: #{tpu_custom_call.1} parent=1 // pred_check_branch
      %40 = sbr.rel (0) target = $region17
    $region16: #{tpu_custom_call.1} parent=1 // pred_region
      %s42 = ssub.s32 2048, 2048
      %43 = vsyncadd [#allocation8], %s42
      %s44 = sshll.u32 [#allocation9], 4
      %s45 = int_to_ptr.vmem [resolvable:$true] %s44
      %50 = dma.hbm_to_vmem [thread:$0]  %s3, 2048, %s45, [#allocation8], 128, 128, 8
    $region17: #{tpu_custom_call.1} parent=1 // pred_fallthru
      _
    // Predicated region
    $region18: #{tpu_custom_call.1} parent=1 // pred_check
      _
    $region19: #{tpu_custom_call.1} parent=1 // pred_check_branch
      %52 = sbr.rel (0) target = $region21
    $region20: #{tpu_custom_call.1} parent=1 // pred_region
      _
    $region21: #{tpu_custom_call.1} parent=1 // pred_fallthru
      _
    // Predicated region
    $region22: #{tpu_custom_call.1} parent=1 // pred_check
      _
    $region23: #{tpu_custom_call.1} parent=1 // pred_check_branch
      %54 = sbr.rel (0) target = $region25
    $region24: #{tpu_custom_call.1} parent=1 // pred_region
      %55 = dma.done [#allocation5], 256
    $region25: #{tpu_custom_call.1} parent=1 // pred_fallthru
      _
    // Predicated region
    $region26: #{tpu_custom_call.1} parent=1 // pred_check
      _
    $region27: #{tpu_custom_call.1} parent=1 // pred_check_branch
      %57 = sbr.rel (0) target = $region29
    $region28: #{tpu_custom_call.1} parent=1 // pred_region
      %58 = dma.done [#allocation8], 2048
    $region29: #{tpu_custom_call.1} parent=1 // pred_fallthru
      _
    // Predicated region
    $region30: #{tpu_custom_call.1} parent=1 // pred_check
      _
    $region31: #{tpu_custom_call.1} parent=1 // pred_check_branch
      %60 = sbr.rel (0) target = $region33
    $region32: #{tpu_custom_call.1} parent=1 // pred_region
      %61 = dma.done [#allocation8], 2048
    $region33: #{tpu_custom_call.1} parent=1 // pred_fallthru
      _
    %p62 = scmp.eq.s32.totalorder 0, 0
    // Predicated region
    $region34: #{tpu_custom_call.1} parent=1 // pred_check
      %p63 = pneg %p62
    $region35: #{tpu_custom_call.1} parent=1 // pred_check_branch
      %65 = sbr.rel (%p63) target = $region37
    $region36: #{tpu_custom_call.1} parent=1 // pred_region
      %66 = vst [vmem:[#allocation2] sm:$0xff] 0.0
      %67 = vst [vmem:[#allocation2 + $0x8] sm:$0xff] 0.0
    $region37: #{tpu_custom_call.1} parent=1 // pred_fallthru
      _
    %p68 = scmp.eq.s32.totalorder 0, 0
    %p69 = pnand %p68, %p62
    %p70 = pneg %p69
    // Predicated region
    $region38: #{tpu_custom_call.1} parent=1 // pred_check
      _
    $region39: #{tpu_custom_call.1} parent=1 // pred_check_branch
      %72 = sbr.rel (%p69) target = $region41
    $region40: #{tpu_custom_call.1} parent=1 // pred_region
      %73 = vst [vmem:[#allocation3] sm:$0xff] 0.0
      %74 = vst [vmem:[#allocation3 + $0x8] sm:$0xff] 0.0
    $region41: #{tpu_custom_call.1} parent=1 // pred_fallthru
      _
    %v75 = vld [vmem:[#allocation2] sm:$0xff]
    %v76 = vld [vmem:[#allocation2 + $0x8] sm:$0xff]
    %v77 = vld [vmem:[#allocation4] sm:$0xff]
    %v78 = vld [vmem:[#allocation4 + $0x8] sm:$0xff]
    %v79 = vld [vmem:[#allocation7] sm:$0xff]
    %v80 = vld [vmem:[#allocation7 + $0x8] sm:$0xff]
    %v81 = vld [vmem:[#allocation7 + $0x10] sm:$0xff]
    %v82 = vld [vmem:[#allocation7 + $0x18] sm:$0xff]
    %v83 = vld [vmem:[#allocation7 + $0x20] sm:$0xff]
    %v84 = vld [vmem:[#allocation7 + $0x28] sm:$0xff]
    %v85 = vld [vmem:[#allocation7 + $0x30] sm:$0xff]
    %v86 = vld [vmem:[#allocation7 + $0x38] sm:$0xff]
    %v87 = vld [vmem:[#allocation7 + $0x40] sm:$0xff]
    %v88 = vld [vmem:[#allocation7 + $0x48] sm:$0xff]
    %v89 = vld [vmem:[#allocation7 + $0x50] sm:$0xff]
    %v90 = vld [vmem:[#allocation7 + $0x58] sm:$0xff]
    %v91 = vld [vmem:[#allocation7 + $0x60] sm:$0xff]
    %v92 = vld [vmem:[#allocation7 + $0x68] sm:$0xff]
    %v93 = vld [vmem:[#allocation7 + $0x70] sm:$0xff]
    %v94 = vld [vmem:[#allocation7 + $0x78] sm:$0xff]
    %95 = vmatprep.subr.mxu0 0.0
    %96 = vmatpush1.msra.mxu0 %v79
    %97 = vmatprep.subr.mxu0 0.0
    %98 = vmatpush1.msra.mxu0 %v80
    %99 = vmatprep.subr.mxu0 0.0
    %100 = vmatpush1.msra.mxu0 %v81
    %101 = vmatprep.subr.mxu0 0.0
    %102 = vmatpush1.msra.mxu0 %v82
    %103 = vmatprep.subr.mxu0 0.0
    %104 = vmatpush1.msra.mxu0 %v83
    %105 = vmatprep.subr.mxu0 0.0
    %106 = vmatpush1.msra.mxu0 %v84
    %107 = vmatprep.subr.mxu0 0.0
    %108 = vmatpush1.msra.mxu0 %v85
    %109 = vmatprep.subr.mxu0 0.0
    %110 = vmatpush1.msra.mxu0 %v86
    %111 = vmatprep.subr.mxu0 0.0
    %112 = vmatpush1.msra.mxu0 %v87
    %113 = vmatprep.subr.mxu0 0.0
    %114 = vmatpush1.msra.mxu0 %v88
    %115 = vmatprep.subr.mxu0 0.0
    %116 = vmatpush1.msra.mxu0 %v89
    %117 = vmatprep.subr.mxu0 0.0
    %118 = vmatpush1.msra.mxu0 %v90
    %119 = vmatprep.subr.mxu0 0.0
    %120 = vmatpush1.msra.mxu0 %v91
    %121 = vmatprep.subr.mxu0 0.0
    %122 = vmatpush1.msra.mxu0 %v92
    %123 = vmatprep.subr.mxu0 0.0
    %124 = vmatpush1.msra.mxu0 %v93
    %125 = vmatprep.subr.mxu0 0.0
    %126 = vmatpush1.msra.mxu0 %v94
    %127 = vmatprep.subr.mxu0 0.0
    %128 = vmatpush1.msra.mxu0 0.0
    %129 = vmatprep.subr.mxu0 0.0
    %130 = vmatpush1.msra.mxu0 0.0
    %131 = vmatprep.subr.mxu0 0.0
    %132 = vmatpush1.msra.mxu0 0.0
    %133 = vmatprep.subr.mxu0 0.0
    %134 = vmatpush1.msra.mxu0 0.0
    %135 = vmatprep.subr.mxu0 0.0
    %136 = vmatpush1.msra.mxu0 0.0
    %137 = vmatprep.subr.mxu0 0.0
    %138 = vmatpush1.msra.mxu0 0.0
    %139 = vmatprep.subr.mxu0 0.0
    %140 = vmatpush1.msra.mxu0 0.0
    %141 = vmatprep.subr.mxu0 0.0
    %142 = vmatpush1.msra.mxu0 0.0
    %143 = vmatprep.subr.mxu0 0.0
    %144 = vmatpush1.msra.mxu0 0.0
    %145 = vmatprep.subr.mxu0 0.0
    %146 = vmatpush1.msra.mxu0 0.0
    %147 = vmatprep.subr.mxu0 0.0
    %148 = vmatpush1.msra.mxu0 0.0
    %149 = vmatprep.subr.mxu0 0.0
    %150 = vmatpush1.msra.mxu0 0.0
    %151 = vmatprep.subr.mxu0 0.0
    %152 = vmatpush1.msra.mxu0 0.0
    %153 = vmatprep.subr.mxu0 0.0
    %154 = vmatpush1.msra.mxu0 0.0
    %155 = vmatprep.subr.mxu0 0.0
    %156 = vmatpush1.msra.mxu0 0.0
    %157 = vmatprep.subr.mxu0 0.0
    %158 = vmatpush1.msra.mxu0 0.0
    %159 = vmatprep.mubr.f32.mxu0 0.0
    %160 = vmatmul.mubr.f32.gmra.mrb[0].mxu0 %v77
    %v161 = vpop.f32.mrb[0].mxu0
    %v162 = vadd.f32 0.0, %v161
    %v163 = vpop.f32.mrb[0].mxu0
    %164 = vmatprep.mubr.f32.mxu0 0.0
    %165 = vmatmul.mubr.f32.gmra.mrb[0].mxu0 %v78
    %v166 = vpop.f32.mrb[0].mxu0
    %v167 = vadd.f32 0.0, %v166
    %v168 = vpop.f32.mrb[0].mxu0
    %169 = vdwg.mxu0
    %v170 = vadd.f32 %v75, %v162
    %v171 = vadd.f32 %v76, %v167
    %172 = vst [vmem:[#allocation2] sm:$0xff] %v170
    %173 = vst [vmem:[#allocation2 + $0x8] sm:$0xff] %v171
    // Predicated region
    $region42: #{tpu_custom_call.1} parent=1 // pred_check
      %p174 = pneg %p62
    $region43: #{tpu_custom_call.1} parent=1 // pred_check_branch
      %176 = sbr.rel (%p174) target = $region45
    $region44: #{tpu_custom_call.1} parent=1 // pred_region
      %v177 = vld [vmem:[#allocation2] sm:$0xff]
      %v178 = vld [vmem:[#allocation2 + $0x8] sm:$0xff]
      %v179 = vld [vmem:[%s2] sm:$0x1]
      %v181 = vlaneseq
      %v182 = vshrl.u32 %v181, 7
      %v183 = vsub.s32 0, %v182
      %v184 = vrot.slane %v179, %v183
      %v186 = vadd.f32 %v177, %v184
      %v187 = vadd.f32 %v178, %v184
      %v188 = vmax.f32 %v186, 0.0
      %v189 = vmax.f32 %v187, 0.0
      %v190 = vld [vmem:[#allocation3] sm:$0xff]
      %v191 = vld [vmem:[#allocation3 + $0x8] sm:$0xff]
      %v192 = vld [vmem:[#allocation9] sm:$0xff]
      %v193 = vld [vmem:[#allocation9 + $0x8] sm:$0xff]
      %v194 = vld [vmem:[#allocation9 + $0x10] sm:$0xff]
      %v195 = vld [vmem:[#allocation9 + $0x18] sm:$0xff]
      %v196 = vld [vmem:[#allocation9 + $0x20] sm:$0xff]
      %v197 = vld [vmem:[#allocation9 + $0x28] sm:$0xff]
      %v198 = vld [vmem:[#allocation9 + $0x30] sm:$0xff]
      %v199 = vld [vmem:[#allocation9 + $0x38] sm:$0xff]
      %v200 = vld [vmem:[#allocation9 + $0x40] sm:$0xff]
      %v201 = vld [vmem:[#allocation9 + $0x48] sm:$0xff]
      %v202 = vld [vmem:[#allocation9 + $0x50] sm:$0xff]
      %v203 = vld [vmem:[#allocation9 + $0x58] sm:$0xff]
      %v204 = vld [vmem:[#allocation9 + $0x60] sm:$0xff]
      %v205 = vld [vmem:[#allocation9 + $0x68] sm:$0xff]
      %v206 = vld [vmem:[#allocation9 + $0x70] sm:$0xff]
      %v207 = vld [vmem:[#allocation9 + $0x78] sm:$0xff]
      %208 = vmatprep.subr.mxu0 0.0
      %209 = vmatpush1.msra.mxu0 %v192
      %210 = vmatprep.subr.mxu0 0.0
      %211 = vmatpush1.msra.mxu0 %v193
      %212 = vmatprep.subr.mxu0 0.0
      %213 = vmatpush1.msra.mxu0 %v194
      %214 = vmatprep.subr.mxu0 0.0
      %215 = vmatpush1.msra.mxu0 %v195
      %216 = vmatprep.subr.mxu0 0.0
      %217 = vmatpush1.msra.mxu0 %v196
      %218 = vmatprep.subr.mxu0 0.0
      %219 = vmatpush1.msra.mxu0 %v197
      %220 = vmatprep.subr.mxu0 0.0
      %221 = vmatpush1.msra.mxu0 %v198
      %222 = vmatprep.subr.mxu0 0.0
      %223 = vmatpush1.msra.mxu0 %v199
      %224 = vmatprep.subr.mxu0 0.0
      %225 = vmatpush1.msra.mxu0 %v200
      %226 = vmatprep.subr.mxu0 0.0
      %227 = vmatpush1.msra.mxu0 %v201
      %228 = vmatprep.subr.mxu0 0.0
      %229 = vmatpush1.msra.mxu0 %v202
      %230 = vmatprep.subr.mxu0 0.0
      %231 = vmatpush1.msra.mxu0 %v203
      %232 = vmatprep.subr.mxu0 0.0
      %233 = vmatpush1.msra.mxu0 %v204
      %234 = vmatprep.subr.mxu0 0.0
      %235 = vmatpush1.msra.mxu0 %v205
      %236 = vmatprep.subr.mxu0 0.0
      %237 = vmatpush1.msra.mxu0 %v206
      %238 = vmatprep.subr.mxu0 0.0
      %239 = vmatpush1.msra.mxu0 %v207
      %240 = vmatprep.subr.mxu0 0.0
      %241 = vmatpush1.msra.mxu0 0.0
      %242 = vmatprep.subr.mxu0 0.0
      %243 = vmatpush1.msra.mxu0 0.0
      %244 = vmatprep.subr.mxu0 0.0
      %245 = vmatpush1.msra.mxu0 0.0
      %246 = vmatprep.subr.mxu0 0.0
      %247 = vmatpush1.msra.mxu0 0.0
      %248 = vmatprep.subr.mxu0 0.0
      %249 = vmatpush1.msra.mxu0 0.0
      %250 = vmatprep.subr.mxu0 0.0
      %251 = vmatpush1.msra.mxu0 0.0
      %252 = vmatprep.subr.mxu0 0.0
      %253 = vmatpush1.msra.mxu0 0.0
      %254 = vmatprep.subr.mxu0 0.0
      %255 = vmatpush1.msra.mxu0 0.0
      %256 = vmatprep.subr.mxu0 0.0
      %257 = vmatpush1.msra.mxu0 0.0
      %258 = vmatprep.subr.mxu0 0.0
      %259 = vmatpush1.msra.mxu0 0.0
      %260 = vmatprep.subr.mxu0 0.0
      %261 = vmatpush1.msra.mxu0 0.0
      %262 = vmatprep.subr.mxu0 0.0
      %263 = vmatpush1.msra.mxu0 0.0
      %264 = vmatprep.subr.mxu0 0.0
      %265 = vmatpush1.msra.mxu0 0.0
      %266 = vmatprep.subr.mxu0 0.0
      %267 = vmatpush1.msra.mxu0 0.0
      %268 = vmatprep.subr.mxu0 0.0
      %269 = vmatpush1.msra.mxu0 0.0
      %270 = vmatprep.subr.mxu0 0.0
      %271 = vmatpush1.msra.mxu0 0.0
      %272 = vmatprep.mubr.f32.mxu0 0.0
      %273 = vmatmul.mubr.f32.gmra.mrb[0].mxu0 %v188
      %v274 = vpop.f32.mrb[0].mxu0
      %v275 = vadd.f32 0.0, %v274
      %v276 = vpop.f32.mrb[0].mxu0
      %277 = vmatprep.mubr.f32.mxu0 0.0
      %278 = vmatmul.mubr.f32.gmra.mrb[0].mxu0 %v189
      %v279 = vpop.f32.mrb[0].mxu0
      %v280 = vadd.f32 0.0, %v279
      %v281 = vpop.f32.mrb[0].mxu0
      %282 = vdwg.mxu0
      %v283 = vadd.f32 %v190, %v275
      %v284 = vadd.f32 %v191, %v280
      %285 = vst [vmem:[#allocation3] sm:$0xff] %v283
      %286 = vst [vmem:[#allocation3 + $0x8] sm:$0xff] %v284
    $region45: #{tpu_custom_call.1} parent=1 // pred_fallthru
      _
    // Predicated region
    $region46: #{tpu_custom_call.1} parent=1 // pred_check
      _
    $region47: #{tpu_custom_call.1} parent=1 // pred_check_branch
      %288 = sbr.rel (%p69) target = $region49
    $region48: #{tpu_custom_call.1} parent=1 // pred_region
      %v289 = vld [vmem:[#allocation3] sm:$0xff]
      %v290 = vld [vmem:[#allocation3 + $0x8] sm:$0xff]
      %v291 = vld [vmem:[%s4] sm:$0x1]
      %v293 = vlaneseq
      %v294 = vshrl.u32 %v293, 7
      %v295 = vsub.s32 0, %v294
      %v296 = vrot.slane %v291, %v295
      %v298 = vadd.f32 %v289, %v296
      %v299 = vadd.f32 %v290, %v296
      %300 = vst [vmem:[#allocation10] sm:$0xff] %v298
      %301 = vst [vmem:[#allocation10 + $0x8] sm:$0xff] %v299
    $region49: #{tpu_custom_call.1} parent=1 // pred_fallthru
      _
    // Predicated region
    $region50: #{tpu_custom_call.1} parent=1 // pred_check
      _
    $region51: #{tpu_custom_call.1} parent=1 // pred_check_branch
      %303 = sbr.rel (0) target = $region53
    $region52: #{tpu_custom_call.1} parent=1 // pred_region
      %s305 = ssub.s32 256, 256
      %306 = vsyncadd [#allocation6], %s305
      %s307 = sshll.u32 [#allocation10], 4
      %s308 = int_to_ptr.vmem [resolvable:$true] %s307
      %313 = dma.vmem_to_hbm [thread:$0]  %s308, 256, %s5, [#allocation6], 128, 128, 8
    $region53: #{tpu_custom_call.1} parent=1 // pred_fallthru
      _
    // Predicated region
    $region54: #{tpu_custom_call.1} parent=1 // pred_check
      _
    $region55: #{tpu_custom_call.1} parent=1 // pred_check_branch
      %315 = sbr.rel (0) target = $region57
    $region56: #{tpu_custom_call.1} parent=1 // pred_region
      %316 = dma.done [#allocation6], 256
    $region57: #{tpu_custom_call.1} parent=1 // pred_fallthru
      _
    %317 = vsyncpa [#allocation5], 1
    %318 = vsyncpa [#allocation8], 1
    %319 = vsyncpa [#allocation6], 1

</llo_original>
